<compile_context>
chip_gen: v6e
topology: v6e:2x2x1
jax: 0.10.0
libtpu: 0.0.40
codegen_flags: <defaults>
</compile_context>

<pallas_src>
import functools
import math

import numpy as np
import jax
import jax.numpy as jnp
from jax import lax
from jax.experimental import pallas as pl
from jax.experimental.pallas import tpu as pltpu

# Large-negative stand-in for -inf. -2^100 is exactly representable in both f32
# and bf16, so the bf16-stored bias and the f32 init value agree bit-exactly and
# fully-masked (padding) rows stay finite instead of producing NaN.
NEG_INF = -float(2.0 ** 100)


def _largest_aligned_divisor(n, target, align):
    """Largest d <= min(n, target) with d % align == 0 and n % d == 0, else n."""
    best = None
    d = align
    lim = min(n, target)
    while d <= lim:
        if n % d == 0:
            best = d
        d += align
    return best if best is not None else n


def _attn_kernel(kvc_ref, kvf_ref,            # scalar-prefetch: (nq,) int32 in SMEM
                 q_ref, k_ref, v_ref, extra_ref,
                 o_ref,
                 m_sc, l_sc, acc_sc,
                 *, scale, tkv, has_mask):
    qi = pl.program_id(2)
    ki = pl.program_id(3)
    nk_active = kvc_ref[qi]

    @pl.when(ki == 0)
    def _init():
        m_sc[...] = jnp.full_like(m_sc, NEG_INF)
        l_sc[...] = jnp.zeros_like(l_sc)
        acc_sc[...] = jnp.zeros_like(acc_sc)

    def _scores():
        # Scale q (Tq*D) once instead of the (Tq,Tkv) scores every step; feed the
        # MXU bf16 operands, accumulate in f32.
        q = (q_ref[0, 0, :, :] * scale).astype(jnp.bfloat16)
        k = k_ref[0, 0, :, :].astype(jnp.bfloat16)
        return lax.dot_general(q, k, (((1,), (1,)), ((), ())),
                               preferred_element_type=jnp.float32)   # (Tq, Tkv)

    def _online_update(s):
        v = v_ref[0, 0, :, :].astype(jnp.bfloat16)
        m_new = jnp.maximum(m_sc[...], jnp.max(s, axis=-1, keepdims=True))
        alpha = jnp.exp(m_sc[...] - m_new)
        p = jnp.exp(s - m_new)
        l_sc[...] = alpha * l_sc[...] + jnp.sum(p, axis=-1, keepdims=True)
        acc_sc[...] = alpha * acc_sc[...] + jnp.dot(
            p.astype(jnp.bfloat16), v, preferred_element_type=jnp.float32)
        m_sc[...] = m_new

    if has_mask:
        # extra_ref = combined (Lformer-layout AND user-mask) additive bias, bf16.
        @pl.when(ki < nk_active)
        def _compute():
            _online_update(_scores() + extra_ref[...].astype(jnp.float32))
    else:
        # extra_ref = per-row block-rounded Lformer extent, (Tq,1) int32.
        nk_full = kvf_ref[qi]

        @pl.when(ki < nk_full)
        def _compute_full():                  # fully visible tile: no bias work
            _online_update(_scores())

        @pl.when(jnp.logical_and(ki >= nk_full, ki < nk_active))
        def _compute_boundary():              # boundary tile: per-row extent mask
            s = _scores()
            col = lax.broadcasted_iota(jnp.int32, s.shape, 1) + ki * tkv
            s = jnp.where(col < extra_ref[...], s, NEG_INF)
            _online_update(s)

    @pl.when(ki == pl.num_programs(3) - 1)
    def _finalize():
        # TODO(synk): approx reciprocal adds ~2^-12 rel error; use exact if needed.
        inv_l = pl.reciprocal(l_sc[...], approx=True)
        o_ref[0, 0, :, :] = (acc_sc[...] * inv_l).astype(o_ref.dtype)


def sparse_inner_attention(q, k, v, att_mask, *, att_block, block_size,
                           tq_target=256, tkv_target=512):
    B, H, T_q, D = q.shape
    css = int(math.sqrt(block_size))
    # Rows t >= css^2 have no active Lformer blocks; the module never sees them
    # (max_seq_length == block_size), so we guard instead of guessing semantics.
    assert T_q <= css * css, "sequence length must not exceed config.block_size"

    pad_len = 0
    if T_q % att_block != 0:
        pad_len = (T_q // att_block + 1) * att_block - T_q
    Tp = T_q + pad_len

    if pad_len:
        pad4 = ((0, 0), (0, 0), (0, pad_len), (0, 0))
        q_p = jnp.pad(q, pad4)
        k_p = jnp.pad(k, pad4)
        v_p = jnp.pad(v, pad4)
    else:
        q_p, k_p, v_p = q, k, v

    # ---- static Lformer sparsity metadata (numpy, trace-time) ------------------
    # Per row-block the visible columns are a contiguous prefix, rounded up to
    # whole att_block columns (DeepSpeed computes every element of an active block).
    nb = Tp // att_block
    blk_ext = np.zeros(nb, dtype=np.int64)
    for r in range(nb):
        ext = 0
        for t in range(r * att_block, (r + 1) * att_block):
            if t < css * css:
                i = int(math.isqrt(t))
                ext = max(ext, (i + 1) ** 2)
        blk_ext[r] = min(-(-ext // att_block) * att_block, Tp)
    row_ext = np.repeat(blk_ext, att_block).astype(np.int32).reshape(Tp, 1)

    # ---- tile sizes -------------------------------------------------------------
    itemsize = jnp.dtype(q.dtype).itemsize
    sub_align = max(8, 32 // max(1, itemsize))        # 8 f32 / 16 bf16 / 32 int8
    Tq = _largest_aligned_divisor(Tp, tq_target, sub_align)   # q tile (sublanes)
    Tkv = _largest_aligned_divisor(Tp, tkv_target, 128)       # kv tile (lanes)
    nq = Tp // Tq
    # kv grid axis sized to the real sparsity: no dead grid steps beyond max extent.
    nk = max(1, -(-int(blk_ext.max()) // Tkv))

    # Active / fully-visible kv tiles per q tile (contiguous prefix), prefetched
    # to SMEM so inactive tiles are skipped and boundary tiles identified cheaply.
    kv_count = np.zeros(nq, dtype=np.int32)
    kv_full = np.zeros(nq, dtype=np.int32)
    for qi in range(nq):
        r = row_ext[qi * Tq:(qi + 1) * Tq, 0]
        kv_count[qi] = max(1, -(-int(r.max()) // Tkv))
        kv_full[qi] = int(r.min()) // Tkv

    scale = float(D) ** -0.5
    has_mask = att_mask is not None

    kv_idx = lambda b, h, qi, ki, kvc, kvf: (b, h, jnp.minimum(ki, kvc[qi] - 1), 0)
    in_specs = [
        pl.BlockSpec((1, 1, Tq, D), lambda b, h, qi, ki, kvc, kvf: (b, h, qi, 0)),
        pl.BlockSpec((1, 1, Tkv, D), kv_idx),
        pl.BlockSpec((1, 1, Tkv, D), kv_idx),
    ]
    if has_mask:
        # Combined additive bias: Lformer block layout merged with the user mask,
        # built ONCE in the wrapper and stored bf16 (half the mask HBM traffic);
        # the kernel just adds it.  masked_fill(am==0,-inf)-1 on active blocks,
        # -inf on inactive blocks.
        am = jnp.pad(att_mask.astype(jnp.float32), ((0, pad_len), (0, pad_len)))
        blk_vis = blk_ext[:, None] > (np.arange(nb) * att_block)[None, :]
        elem_vis = np.kron(blk_vis, np.ones((att_block, att_block), dtype=bool))
        bias = jnp.where(jnp.asarray(elem_vis) & (am != 0.0), am - 1.0, NEG_INF)
        extra = bias.astype(jnp.bfloat16)
        in_specs.append(pl.BlockSpec(
            (Tq, Tkv),
            lambda b, h, qi, ki, kvc, kvf: (qi, jnp.minimum(ki, kvc[qi] - 1))))
    else:
        # Fast path: no mask stream at all; only a tiny per-row extent column.
        extra = jnp.asarray(row_ext)
        in_specs.append(pl.BlockSpec((Tq, 1),
                                     lambda b, h, qi, ki, kvc, kvf: (qi, 0)))

    out = pl.pallas_call(
        functools.partial(_attn_kernel, scale=scale, tkv=Tkv, has_mask=has_mask),
        out_shape=jax.ShapeDtypeStruct((B, H, Tp, D), q.dtype),
        grid_spec=pltpu.PrefetchScalarGridSpec(
            num_scalar_prefetch=2,
            grid=(B, H, nq, nk),
            in_specs=in_specs,
            out_specs=pl.BlockSpec((1, 1, Tq, D),
                                   lambda b, h, qi, ki, kvc, kvf: (b, h, qi, 0)),
            scratch_shapes=[
                pltpu.VMEM((Tq, 1), jnp.float32),   # running max m
                pltpu.VMEM((Tq, 1), jnp.float32),   # running sum l
                pltpu.VMEM((Tq, D), jnp.float32),   # output accumulator
            ],
        ),
        compiler_params=pltpu.CompilerParams(
            dimension_semantics=("parallel", "parallel", "parallel", "arbitrary"),
            # Footprint is ~1-2 MiB double-buffered; 32 MiB is safe on v5e/v6e/v7x
            # (v7x physical VMEM is 64 MiB per TensorCore).
            vmem_limit_bytes=32 * 1024 * 1024,
        ),
    )(jnp.asarray(kv_count), jnp.asarray(kv_full), q_p, k_p, v_p, extra)

    return out[:, :, :T_q, :]


# ---------------- dense pure-JAX reference (module semantics) --------------------
def _dense_reference(q, k, v, att_mask, *, att_block, block_size):
    B, H, T_q, D = q.shape
    css = int(math.sqrt(block_size))
    pad_len = (0 if T_q % att_block == 0
               else (T_q // att_block + 1) * att_block - T_q)
    Tp = T_q + pad_len
    pad4 = ((0, 0), (0, 0), (0, pad_len), (0, 0))
    q_p = jnp.pad(q, pad4)
    k_p = jnp.pad(k, pad4)
    v_p = jnp.pad(v, pad4)
    if att_mask is not None:
        am = jnp.pad(att_mask.astype(jnp.float32), ((0, pad_len), (0, pad_len)))
        add_mask = jnp.where(am == 0, NEG_INF, am) - 1.0
    else:
        add_mask = jnp.zeros((Tp, Tp), jnp.float32)
    elem = np.zeros((Tp, Tp), dtype=bool)
    for i in range(css):
        elem[i * i:(i + 1) * (i + 1), :(i + 1) * (i + 1)] = True
    nb = Tp // att_block
    layout = np.zeros((nb, nb), dtype=bool)
    for r in range(nb):
        for c in range(nb):
            layout[r, c] = elem[r * att_block:(r + 1) * att_block,
                                c * att_block:(c + 1) * att_block].any()
    block_elem = np.kron(layout, np.ones((att_block, att_block), dtype=bool))
    bias = jnp.where(jnp.asarray(block_elem), add_mask, NEG_INF)
    s = jnp.einsum("bhqd,bhkd->bhqk", q_p, k_p).astype(jnp.float32)
    s = s * (float(D) ** -0.5) + bias
    p = jax.nn.softmax(s, axis=-1)
    o = jnp.einsum("bhqk,bhkd->bhqd", p, v_p.astype(jnp.float32))
    return o.astype(q.dtype)[:, :, :T_q, :]


if __name__ == "__main__":
    def lformer_elem_mask(T, css):
        m = np.zeros((T, T), dtype=np.float32)
        for i in range(css):
            m[i * i:(i + 1) * (i + 1), :(i + 1) * (i + 1)] = 1.0
        return m

    def run_case(B, H, T, D, block_size, att_block, with_mask, **tile_kw):
        key = jax.random.PRNGKey(0)
        kq, kk, kv_ = jax.random.split(key, 3)
        q = jax.random.normal(kq, (B, H, T, D), dtype=jnp.float32)
        k = jax.random.normal(kk, (B, H, T, D), dtype=jnp.float32)
        v = jax.random.normal(kv_, (B, H, T, D), dtype=jnp.float32)
        css = int(math.sqrt(block_size))
        am = jnp.asarray(lformer_elem_mask(T, css)) if with_mask else None
        y = sparse_inner_attention(q, k, v, am, att_block=att_block,
                                   block_size=block_size, **tile_kw)
        jax.block_until_ready(y)
        assert y.shape == (B, H, T, D)
        y_ref = _dense_reference(q, k, v, am, att_block=att_block,
                                 block_size=block_size)
        np.testing.assert_allclose(np.asarray(y), np.asarray(y_ref),
                                   rtol=3e-2, atol=3e-2)

    # Small config consistent with the module (block_size=64 -> css=8).
    run_case(2, 2, 20, 32, 64, 16, True)      # user-mask path (combined bf16 bias)
    run_case(2, 2, 20, 32, 64, 16, False)     # no-mask fast path
    # Slightly longer sequence with small tiles to exercise multi-tile grids,
    # inactive-kv-tile skipping and the boundary-tile branch.
    run_case(2, 2, 250, 32, 256, 16, True, tq_target=64, tkv_target=128)
    run_case(2, 2, 250, 32, 256, 16, False, tq_target=64, tkv_target=128)

    print("KERNEL_OK")
</pallas_src>

<mosaic_0001>
module attributes {stable_mosaic.version = 11 : i64} {
  func.func @_attn_kernel(%arg0: i32, %arg1: i32, %arg2: i32, %arg3: i32, %arg4: memref<1xi32, #tpu.memory_space<smem>>, %arg5: memref<1xi32, #tpu.memory_space<smem>>, %arg6: memref<1x1x32x32xf32, #tpu.memory_space<vmem>>, %arg7: memref<1x1x32x32xf32, #tpu.memory_space<vmem>>, %arg8: memref<1x1x32x32xf32, #tpu.memory_space<vmem>>, %arg9: memref<32x32xbf16, #tpu.memory_space<vmem>>, %arg10: memref<1x1x32x32xf32, #tpu.memory_space<vmem>>, %arg11: memref<32x1xf32, #tpu.memory_space<vmem>>, %arg12: memref<32x1xf32, #tpu.memory_space<vmem>>, %arg13: memref<32x32xf32, #tpu.memory_space<vmem>>) attributes {dimension_semantics = [#tpu.dimension_semantics<parallel>, #tpu.dimension_semantics<parallel>, #tpu.dimension_semantics<parallel>, #tpu.dimension_semantics<arbitrary>], iteration_bounds = array<i64: 2, 2, 1, 1>, scalar_prefetch = 2 : i64, scratch_operands = 3 : i64, tpu.core_type = #tpu.core_type<tc>, window_params = [{transform_indices = @transform_0, window_bounds = array<i64: 1, 1, 32, 32>}, {transform_indices = @transform_1, window_bounds = array<i64: 1, 1, 32, 32>}, {transform_indices = @transform_2, window_bounds = array<i64: 1, 1, 32, 32>}, {transform_indices = @transform_3, window_bounds = array<i64: 32, 32>}, {transform_indices = @transform_4, window_bounds = array<i64: 1, 1, 32, 32>}]} {
    %0 = arith.index_cast %arg2 : i32 to index
    %1 = memref.load %arg4[%0] : memref<1xi32, #tpu.memory_space<smem>>
    %c0_i32 = arith.constant 0 : i32
    %2 = arith.cmpi eq, %arg3, %c0_i32 : i32
    %3 = arith.extui %2 : i1 to i32
    %c0_i32_0 = arith.constant 0 : i32
    %4 = arith.cmpi ne, %3, %c0_i32_0 : i32
    scf.if %4 {
      %cst = arith.constant -1.2676506E+30 : f32
      %11 = vector.broadcast %cst : f32 to vector<32x1xf32>
      %c0 = arith.constant 0 : index
      %c0_4 = arith.constant 0 : index
      %12 = vector.load %arg11[%c0, %c0_4] : memref<32x1xf32, #tpu.memory_space<vmem>>, vector<32x1xf32>
      tpu.vector_store %arg11[%c0, %c0_4], %11 {strides = array<i32>} : memref<32x1xf32, #tpu.memory_space<vmem>>, vector<32x1xf32>,
      %cst_5 = arith.constant 0.000000e+00 : f32
      %13 = vector.broadcast %cst_5 : f32 to vector<32x1xf32>
      %c0_6 = arith.constant 0 : index
      %c0_7 = arith.constant 0 : index
      %14 = vector.load %arg12[%c0_6, %c0_7] : memref<32x1xf32, #tpu.memory_space<vmem>>, vector<32x1xf32>
      tpu.vector_store %arg12[%c0_6, %c0_7], %13 {strides = array<i32>} : memref<32x1xf32, #tpu.memory_space<vmem>>, vector<32x1xf32>,
      %cst_8 = arith.constant 0.000000e+00 : f32
      %15 = vector.broadcast %cst_8 : f32 to vector<32x32xf32>
      %c0_9 = arith.constant 0 : index
      %c0_10 = arith.constant 0 : index
      %16 = vector.load %arg13[%c0_9, %c0_10] : memref<32x32xf32, #tpu.memory_space<vmem>>, vector<32x32xf32>
      tpu.vector_store %arg13[%c0_9, %c0_10], %15 {strides = array<i32>} : memref<32x32xf32, #tpu.memory_space<vmem>>, vector<32x32xf32>,
    } else {
    }
    %5 = arith.cmpi slt, %arg3, %1 : i32
    %6 = arith.extui %5 : i1 to i32
    %c0_i32_1 = arith.constant 0 : i32
    %7 = arith.cmpi ne, %6, %c0_i32_1 : i32
    scf.if %7 {
      %c0 = arith.constant 0 : index
      %c0_4 = arith.constant 0 : index
      %c0_5 = arith.constant 0 : index
      %c0_6 = arith.constant 0 : index
      %11 = vector.load %arg6[%c0, %c0_4, %c0_5, %c0_6] : memref<1x1x32x32xf32, #tpu.memory_space<vmem>>, vector<1x1x32x32xf32>
      %12 = vector.shape_cast %11 : vector<1x1x32x32xf32> to vector<32x32xf32>
      %cst = arith.constant 0.176776692 : f32
      %13 = vector.broadcast %cst : f32 to vector<32x32xf32>
      %14 = arith.mulf %12, %13 : vector<32x32xf32>
      %15 = arith.truncf %14 : vector<32x32xf32> to vector<32x32xbf16>
      %c0_7 = arith.constant 0 : index
      %c0_8 = arith.constant 0 : index
      %c0_9 = arith.constant 0 : index
      %c0_10 = arith.constant 0 : index
      %16 = vector.load %arg7[%c0_7, %c0_8, %c0_9, %c0_10] : memref<1x1x32x32xf32, #tpu.memory_space<vmem>>, vector<1x1x32x32xf32>
      %17 = vector.shape_cast %16 : vector<1x1x32x32xf32> to vector<32x32xf32>
      %18 = arith.truncf %17 : vector<32x32xf32> to vector<32x32xbf16>
      %cst_11 = arith.constant dense<0.000000e+00> : vector<32x32xf32>
      %19 = tpu.matmul %15, %18, %cst_11 {dimension_numbers = #tpu.dot_dimension_numbers<[1], [1], [0], [0], [0, 0, 1, 0], [], []>} : vector<32x32xbf16>, vector<32x32xbf16>, vector<32x32xf32> -> vector<32x32xf32>
      %c0_12 = arith.constant 0 : index
      %c0_13 = arith.constant 0 : index
      %20 = vector.load %arg9[%c0_12, %c0_13] : memref<32x32xbf16, #tpu.memory_space<vmem>>, vector<32x32xbf16>
      %21 = arith.extf %20 : vector<32x32xbf16> to vector<32x32xf32>
      %22 = arith.addf %19, %21 : vector<32x32xf32>
      %c0_14 = arith.constant 0 : index
      %c0_15 = arith.constant 0 : index
      %c0_16 = arith.constant 0 : index
      %c0_17 = arith.constant 0 : index
      %23 = vector.load %arg8[%c0_14, %c0_15, %c0_16, %c0_17] : memref<1x1x32x32xf32, #tpu.memory_space<vmem>>, vector<1x1x32x32xf32>
      %24 = vector.shape_cast %23 : vector<1x1x32x32xf32> to vector<32x32xf32>
      %25 = arith.truncf %24 : vector<32x32xf32> to vector<32x32xbf16>
      %c0_18 = arith.constant 0 : index
      %c0_19 = arith.constant 0 : index
      %26 = vector.load %arg11[%c0_18, %c0_19] : memref<32x1xf32, #tpu.memory_space<vmem>>, vector<32x1xf32>
      %cst_20 = arith.constant dense<0xFF800000> : vector<32xf32>
      %27 = vector.multi_reduction <maximumf>, %22, %cst_20 [1] : vector<32x32xf32> to vector<32xf32>
      %28 = vector.shape_cast %27 : vector<32xf32> to vector<32x1xf32>
      %29 = arith.maximumf %26, %28 : vector<32x1xf32>
      %c0_21 = arith.constant 0 : index
      %c0_22 = arith.constant 0 : index
      %30 = vector.load %arg11[%c0_21, %c0_22] : memref<32x1xf32, #tpu.memory_space<vmem>>, vector<32x1xf32>
      %31 = arith.subf %30, %29 : vector<32x1xf32>
      %32 = math.exp %31 : vector<32x1xf32>
      %33 = vector.broadcast %29 : vector<32x1xf32> to vector<32x32xf32>
      %34 = arith.subf %22, %33 : vector<32x32xf32>
      %35 = math.exp %34 : vector<32x32xf32>
      %c0_23 = arith.constant 0 : index
      %c0_24 = arith.constant 0 : index
      %36 = vector.load %arg12[%c0_23, %c0_24] : memref<32x1xf32, #tpu.memory_space<vmem>>, vector<32x1xf32>
      %37 = arith.mulf %32, %36 : vector<32x1xf32>
      %cst_25 = arith.constant dense<0.000000e+00> : vector<32xf32>
      %38 = vector.multi_reduction <add>, %35, %cst_25 [1] : vector<32x32xf32> to vector<32xf32>
      %39 = vector.shape_cast %38 : vector<32xf32> to vector<32x1xf32>
      %40 = arith.addf %37, %39 : vector<32x1xf32>
      %c0_26 = arith.constant 0 : index
      %c0_27 = arith.constant 0 : index
      %41 = vector.load %arg12[%c0_26, %c0_27] : memref<32x1xf32, #tpu.memory_space<vmem>>, vector<32x1xf32>
      tpu.vector_store %arg12[%c0_26, %c0_27], %40 {strides = array<i32>} : memref<32x1xf32, #tpu.memory_space<vmem>>, vector<32x1xf32>,
      %c0_28 = arith.constant 0 : index
      %c0_29 = arith.constant 0 : index
      %42 = vector.load %arg13[%c0_28, %c0_29] : memref<32x32xf32, #tpu.memory_space<vmem>>, vector<32x32xf32>
      %43 = vector.broadcast %32 : vector<32x1xf32> to vector<32x32xf32>
      %44 = arith.mulf %43, %42 : vector<32x32xf32>
      %45 = arith.truncf %35 : vector<32x32xf32> to vector<32x32xbf16>
      %cst_30 = arith.constant dense<0.000000e+00> : vector<32x32xf32>
      %46 = tpu.matmul %45, %25, %cst_30 {dimension_numbers = #tpu.dot_dimension_numbers<[1], [0], [0], [1], [0, 0, 1, 1], [], []>} : vector<32x32xbf16>, vector<32x32xbf16>, vector<32x32xf32> -> vector<32x32xf32>
      %47 = arith.addf %44, %46 : vector<32x32xf32>
      %c0_31 = arith.constant 0 : index
      %c0_32 = arith.constant 0 : index
      %48 = vector.load %arg13[%c0_31, %c0_32] : memref<32x32xf32, #tpu.memory_space<vmem>>, vector<32x32xf32>
      tpu.vector_store %arg13[%c0_31, %c0_32], %47 {strides = array<i32>} : memref<32x32xf32, #tpu.memory_space<vmem>>, vector<32x32xf32>,
      %c0_33 = arith.constant 0 : index
      %c0_34 = arith.constant 0 : index
      %49 = vector.load %arg11[%c0_33, %c0_34] : memref<32x1xf32, #tpu.memory_space<vmem>>, vector<32x1xf32>
      tpu.vector_store %arg11[%c0_33, %c0_34], %29 {strides = array<i32>} : memref<32x1xf32, #tpu.memory_space<vmem>>, vector<32x1xf32>,
    } else {
    }
    %c0_i32_2 = arith.constant 0 : i32
    %8 = arith.cmpi eq, %arg3, %c0_i32_2 : i32
    %9 = arith.extui %8 : i1 to i32
    %c0_i32_3 = arith.constant 0 : i32
    %10 = arith.cmpi ne, %9, %c0_i32_3 : i32
    scf.if %10 {
      %c0 = arith.constant 0 : index
      %c0_4 = arith.constant 0 : index
      %11 = vector.load %arg12[%c0, %c0_4] : memref<32x1xf32, #tpu.memory_space<vmem>>, vector<32x1xf32>
      %12 = tpu.reciprocal %11 {approx = true} : vector<32x1xf32> -> vector<32x1xf32>
      %c0_5 = arith.constant 0 : index
      %c0_6 = arith.constant 0 : index
      %13 = vector.load %arg13[%c0_5, %c0_6] : memref<32x32xf32, #tpu.memory_space<vmem>>, vector<32x32xf32>
      %14 = vector.broadcast %12 : vector<32x1xf32> to vector<32x32xf32>
      %15 = arith.mulf %13, %14 : vector<32x32xf32>
      %c0_7 = arith.constant 0 : index
      %c0_8 = arith.constant 0 : index
      %c0_9 = arith.constant 0 : index
      %c0_10 = arith.constant 0 : index
      %16 = vector.load %arg10[%c0_7, %c0_8, %c0_9, %c0_10] : memref<1x1x32x32xf32, #tpu.memory_space<vmem>>, vector<1x1x32x32xf32>
      %17 = vector.shape_cast %16 : vector<1x1x32x32xf32> to vector<32x32xf32>
      %18 = vector.shape_cast %15 : vector<32x32xf32> to vector<1x1x32x32xf32>
      tpu.vector_store %arg10[%c0_7, %c0_8, %c0_9, %c0_10], %18 {strides = array<i32>} : memref<1x1x32x32xf32, #tpu.memory_space<vmem>>, vector<1x1x32x32xf32>,
    } else {
    }
    return
  }
  func.func @transform_0(%arg0: i32, %arg1: i32, %arg2: i32, %arg3: i32, %arg4: memref<1xi32, #tpu.memory_space<smem>>, %arg5: memref<1xi32, #tpu.memory_space<smem>>) -> (i32, i32, i32, i32) {
    %c0_i32 = arith.constant 0 : i32
    %c0_i32_0 = arith.constant 0 : i32
    return %arg0, %arg1, %arg2, %c0_i32 : i32, i32, i32, i32
  }
  func.func @transform_1(%arg0: i32, %arg1: i32, %arg2: i32, %arg3: i32, %arg4: memref<1xi32, #tpu.memory_space<smem>>, %arg5: memref<1xi32, #tpu.memory_space<smem>>) -> (i32, i32, i32, i32) {
    %0 = arith.index_cast %arg2 : i32 to index
    %1 = memref.load %arg4[%0] : memref<1xi32, #tpu.memory_space<smem>>
    %c1_i32 = arith.constant 1 : i32
    %2 = arith.subi %1, %c1_i32 : i32
    %3 = arith.minsi %arg3, %2 : i32
    %c0_i32 = arith.constant 0 : i32
    %c0_i32_0 = arith.constant 0 : i32
    return %arg0, %arg1, %3, %c0_i32 : i32, i32, i32, i32
  }
  func.func @transform_2(%arg0: i32, %arg1: i32, %arg2: i32, %arg3: i32, %arg4: memref<1xi32, #tpu.memory_space<smem>>, %arg5: memref<1xi32, #tpu.memory_space<smem>>) -> (i32, i32, i32, i32) {
    %0 = arith.index_cast %arg2 : i32 to index
    %1 = memref.load %arg4[%0] : memref<1xi32, #tpu.memory_space<smem>>
    %c1_i32 = arith.constant 1 : i32
    %2 = arith.subi %1, %c1_i32 : i32
    %3 = arith.minsi %arg3, %2 : i32
    %c0_i32 = arith.constant 0 : i32
    %c0_i32_0 = arith.constant 0 : i32
    return %arg0, %arg1, %3, %c0_i32 : i32, i32, i32, i32
  }
  func.func @transform_3(%arg0: i32, %arg1: i32, %arg2: i32, %arg3: i32, %arg4: memref<1xi32, #tpu.memory_space<smem>>, %arg5: memref<1xi32, #tpu.memory_space<smem>>) -> (i32, i32) {
    %0 = arith.index_cast %arg2 : i32 to index
    %1 = memref.load %arg4[%0] : memref<1xi32, #tpu.memory_space<smem>>
    %c1_i32 = arith.constant 1 : i32
    %2 = arith.subi %1, %c1_i32 : i32
    %3 = arith.minsi %arg3, %2 : i32
    %c0_i32 = arith.constant 0 : i32
    return %arg2, %3 : i32, i32
  }
  func.func @transform_4(%arg0: i32, %arg1: i32, %arg2: i32, %arg3: i32, %arg4: memref<1xi32, #tpu.memory_space<smem>>, %arg5: memref<1xi32, #tpu.memory_space<smem>>) -> (i32, i32, i32, i32) {
    %c0_i32 = arith.constant 0 : i32
    %c0_i32_0 = arith.constant 0 : i32
    return %arg0, %arg1, %arg2, %c0_i32 : i32, i32, i32, i32
  }
}

</mosaic_0001>

<llo_original>
// kernel: tpu_custom_call.1
$region0: #{tpu_custom_call.1}
  #allocation0 [shape = 'u32[]', space=smem, size = 0x4, offset = 0x4, fixed_abs, tag = 'smem constant byte address 0x4 - core index']
  #allocation1 [shape = 'u32[144,128]{1,0:T(1,128)}', space=vmem, size = 0x12000, scoped, tag = 'internal scratch']
  #allocation2 [shape = 'f32[32,1]{1,0:T(8,128)}', space=vmem, size = 0x4000, scoped, tag = 'scratch operand']
  #allocation3 [shape = 'f32[32,1]{1,0:T(8,128)}', space=vmem, size = 0x4000, scoped, tag = 'scratch operand']
  #allocation4 [shape = 'f32[32,32]{1,0:T(8,128)}', space=vmem, size = 0x4000, scoped, tag = 'scratch operand']
  #allocation5 [shape = 's32[1]{0}', space=sflag, size = 0x4, scoped, tag = 'scoped memory for tpu_custom_call.1']
  #allocation6 [shape = 's32[1]{0:T(128)S(6)}', space=smem, size = 0x200, scoped, tag = 'prefetched SMEM operand 0']
  #allocation7 [shape = 's32[1]{0:T(128)S(6)}', space=smem, size = 0x200, scoped, tag = 'prefetched SMEM operand 1']
  %s0 = inlined_call_operand.<no memory space> [shape: s32[1], index: 0, kind: input, shape index: {}]
  %s1 = inlined_call_operand.<no memory space> [shape: s32[1], index: 1, kind: input, shape index: {}]
  %s2 = inlined_call_operand.hbm [shape: f32[2,2,32,32], index: 2, kind: input, shape index: {}]
  %s3 = inlined_call_operand.hbm [shape: f32[2,2,32,32], index: 3, kind: input, shape index: {}]
  %s4 = inlined_call_operand.hbm [shape: f32[2,2,32,32], index: 4, kind: input, shape index: {}]
  %s5 = inlined_call_operand.hbm [shape: bf16[32,32], index: 5, kind: input, shape index: {}]
  %s6 = inlined_call_operand.hbm [shape: f32[2,2,32,32], index: 6, kind: output, shape index: {}]
  %s7 = sld [smem:[#allocation0]]
  $region77: #{tpu_custom_call.1} parent=0
    _
  %s9 = ssub.s32 1, %s7
  %s10 = scalar_select 0, %s9, %s7
  %11 = sst [smem:[#allocation6]] %s0
  %12 = sst [smem:[#allocation7]] %s1
  $region1: #{tpu_custom_call.1} parent=0
    #allocation8 [shape = 'u8[32768]{0}', space=vmem, size = 0x8000, scoped, tag = 'input window, operand 2']
    #allocation9 [shape = 's32[2]{0}', space=sflag, size = 0x8, scoped, tag = 'scoped memory for tpu_custom_call.1']
    #allocation10 [shape = 's32[2]{0}', space=sflag, size = 0x8, scoped, tag = 'scoped memory for tpu_custom_call.1']
    #allocation11 [shape = 'u8[32768]{0}', space=vmem, size = 0x8000, scoped, tag = 'input window, operand 3']
    #allocation12 [shape = 's32[2]{0}', space=sflag, size = 0x8, scoped, tag = 'scoped memory for tpu_custom_call.1']
    #allocation13 [shape = 'u8[32768]{0}', space=vmem, size = 0x8000, scoped, tag = 'input window, operand 4']
    #allocation14 [shape = 'u8[8192]{0}', space=vmem, size = 0x2000, scoped, tag = 'input window, operand 5, single buffered']
    #allocation15 [shape = 's32[1]{0}', space=sflag, size = 0x4, scoped, tag = 'scoped memory for tpu_custom_call.1']
    #allocation16 [shape = 'u8[32768]{0}', space=vmem, size = 0x8000, scoped, tag = 'output window, operand 0']
    %13 = vsyncpa [#allocation9], 0
    %s14 = scalar_lea.sflag [#allocation9], 1
    %15 = vsyncpa %s14, 0
    %16 = vsyncpa [#allocation12], 0
    %s17 = scalar_lea.sflag [#allocation12], 1
    %18 = vsyncpa %s17, 0
    %19 = vsyncpa [#allocation15], 0
    %20 = vsyncpa [#allocation10], 0
    %s21 = scalar_lea.sflag [#allocation10], 1
    %22 = vsyncpa %s21, 0
    loop: start=0, step=1, limit=6
    $region2: #{tpu_custom_call.1} parent=1 // loop_pre_header
      _
    $region3: #{tpu_custom_call.1} parent=1 // loop_header
      %s24 = sphi 0, %s28
      %p25 = scmp.ge.s32.totalorder %s24, 6
      %s31 = sphi 0, %s57
      %s32 = sphi 0, %s53
      %s33 = sphi 0, %s49
      %s34 = sphi 0, %s45
      %s35 = sphi 0, %s31
      %s36 = sphi 0, %s32
      %s37 = sphi 0, %s33
      %s38 = sphi 0, %s34
      %s39 = sphi 0, %s35
      %s40 = sphi 0, %s36
      %s41 = sphi 0, %s37
      %s42 = sphi 0, %s38
      %s64 = sphi 0, %s66
      %s67 = sphi 0, %s64
      %s68 = sphi 0, %s67
      %s84 = sphi 0, %s68
      %s102 = sphi 0, %s104
      %s105 = sphi 0, %s102
      %s106 = sphi 0, %s105
      %s122 = sphi 0, %s106
      %s140 = sphi 0, %s142
      %s143 = sphi 0, %s140
      %s144 = sphi 0, %s143
      %s160 = sphi 0, %s144
      %s176 = sphi 0, %s178
      %s179 = sphi 0, %s176
      %s180 = sphi 0, %s179
      %s196 = sphi 0, %s180
      %s206 = sphi 0, %s208
      %s209 = sphi 0, %s206
      %s210 = sphi 0, %s209
      %s226 = sphi 0, %s210
    $region4: #{tpu_custom_call.1} parent=1 // loop_header_branch
      %27 = sbr.rel (%p25) target = $region8
    $region5: #{tpu_custom_call.1} parent=1 // loop_body
      %s29 = ssub.s32 %s24, 1
      %s30 = ssub.s32 %s24, 2
      %s43 = sadd.s32 1, %s34
      %p44 = scmp.ge.s32.totalorder %s43, 1
      %s45 = scalar_select %p44, 0, %s43
      %s46 = sadd.s32 1, %s33
      %s47 = scalar_select %p44, %s46, %s33
      %p48 = scmp.ge.s32.totalorder %s47, 1
      %s49 = scalar_select %p48, 0, %s47
      %s50 = sadd.s32 1, %s32
      %s51 = scalar_select %p48, %s50, %s32
      %p52 = scmp.ge.s32.totalorder %s51, 2
      %s53 = scalar_select %p52, 0, %s51
      %s54 = sadd.s32 1, %s31
      %s55 = scalar_select %p52, %s54, %s31
      %p56 = scmp.ge.s32.totalorder %s55, 2
      %s57 = scalar_select %p56, 0, %s55
      %s58 = ssub.s32 %s31, %s57
      %s59 = ssub.s32 %s32, %s53
      %s60 = sor.u32 %s58, %s59
      %s61 = ssub.s32 %s33, %s49
      %s62 = sor.u32 %s60, %s61
      %p63 = scmp.eq.s32.totalorder %s62, 0
      %s65 = sadd.s32 %s64, 1
      %s66 = scalar_select %p63, %s64, %s65
      %p69 = pneg %p63
      %p70 = scmp.eq.s32.totalorder %s24, 3
      %p71 = por %p69, %p70
      %p72 = scmp.ne.s32.totalorder %s64, %s67
      %p73 = scmp.eq.s32.totalorder %s24, 0
      %p74 = por %p72, %p73
      %p75 = scmp.ne.s32.totalorder %s64, %s67
      %p76 = scmp.eq.s32.totalorder %s29, 3
      %p77 = por %p75, %p76
      %p78 = scmp.ne.s32.totalorder %s67, %s68
      %p79 = scmp.eq.s32.totalorder %s29, 0
      %p80 = por %p78, %p79
      %p81 = scmp.ne.s32.totalorder %s67, %s68
      %p82 = scmp.eq.s32.totalorder %s30, 3
      %p83 = por %p81, %p82
      %p85 = scmp.ne.s32.totalorder %s68, %s84
      %p86 = scmp.eq.s32.totalorder %s30, 0
      %p87 = por %p85, %p86
      %s88 = sld [smem:[#allocation6 + %s33]]
      %s89 = ssub.s32 %s88, 1
      %p90 = scmp.lt.s32.totalorder %s34, %s89
      %s91 = scalar_select %p90, %s34, %s89
      %s92 = sld [smem:[#allocation6 + %s49]]
      %s93 = ssub.s32 %s92, 1
      %p94 = scmp.lt.s32.totalorder %s45, %s93
      %s95 = scalar_select %p94, %s45, %s93
      %s96 = ssub.s32 %s31, %s57
      %s97 = ssub.s32 %s32, %s53
      %s98 = sor.u32 %s96, %s97
      %s99 = ssub.s32 %s91, %s95
      %s100 = sor.u32 %s98, %s99
      %p101 = scmp.eq.s32.totalorder %s100, 0
      %s103 = sadd.s32 %s102, 1
      %s104 = scalar_select %p101, %s102, %s103
      %p107 = pneg %p101
      %p108 = scmp.eq.s32.totalorder %s24, 3
      %p109 = por %p107, %p108
      %p110 = scmp.ne.s32.totalorder %s102, %s105
      %p111 = scmp.eq.s32.totalorder %s24, 0
      %p112 = por %p110, %p111
      %p113 = scmp.ne.s32.totalorder %s102, %s105
      %p114 = scmp.eq.s32.totalorder %s29, 3
      %p115 = por %p113, %p114
      %p116 = scmp.ne.s32.totalorder %s105, %s106
      %p117 = scmp.eq.s32.totalorder %s29, 0
      %p118 = por %p116, %p117
      %p119 = scmp.ne.s32.totalorder %s105, %s106
      %p120 = scmp.eq.s32.totalorder %s30, 3
      %p121 = por %p119, %p120
      %p123 = scmp.ne.s32.totalorder %s106, %s122
      %p124 = scmp.eq.s32.totalorder %s30, 0
      %p125 = por %p123, %p124
      %s126 = sld [smem:[#allocation6 + %s33]]
      %s127 = ssub.s32 %s126, 1
      %p128 = scmp.lt.s32.totalorder %s34, %s127
      %s129 = scalar_select %p128, %s34, %s127
      %s130 = sld [smem:[#allocation6 + %s49]]
      %s131 = ssub.s32 %s130, 1
      %p132 = scmp.lt.s32.totalorder %s45, %s131
      %s133 = scalar_select %p132, %s45, %s131
      %s134 = ssub.s32 %s31, %s57
      %s135 = ssub.s32 %s32, %s53
      %s136 = sor.u32 %s134, %s135
      %s137 = ssub.s32 %s129, %s133
      %s138 = sor.u32 %s136, %s137
      %p139 = scmp.eq.s32.totalorder %s138, 0
      %s141 = sadd.s32 %s140, 1
      %s142 = scalar_select %p139, %s140, %s141
      %p145 = pneg %p139
      %p146 = scmp.eq.s32.totalorder %s24, 3
      %p147 = por %p145, %p146
      %p148 = scmp.ne.s32.totalorder %s140, %s143
      %p149 = scmp.eq.s32.totalorder %s24, 0
      %p150 = por %p148, %p149
      %p151 = scmp.ne.s32.totalorder %s140, %s143
      %p152 = scmp.eq.s32.totalorder %s29, 3
      %p153 = por %p151, %p152
      %p154 = scmp.ne.s32.totalorder %s143, %s144
      %p155 = scmp.eq.s32.totalorder %s29, 0
      %p156 = por %p154, %p155
      %p157 = scmp.ne.s32.totalorder %s143, %s144
      %p158 = scmp.eq.s32.totalorder %s30, 3
      %p159 = por %p157, %p158
      %p161 = scmp.ne.s32.totalorder %s144, %s160
      %p162 = scmp.eq.s32.totalorder %s30, 0
      %p163 = por %p161, %p162
      %s164 = sld [smem:[#allocation6 + %s33]]
      %s165 = ssub.s32 %s164, 1
      %p166 = scmp.lt.s32.totalorder %s34, %s165
      %s167 = scalar_select %p166, %s34, %s165
      %s168 = sld [smem:[#allocation6 + %s49]]
      %s169 = ssub.s32 %s168, 1
      %p170 = scmp.lt.s32.totalorder %s45, %s169
      %s171 = scalar_select %p170, %s45, %s169
      %s172 = ssub.s32 %s33, %s49
      %s173 = ssub.s32 %s167, %s171
      %s174 = sor.u32 %s172, %s173
      %p175 = scmp.eq.s32.totalorder %s174, 0
      %s177 = sadd.s32 %s176, 1
      %s178 = scalar_select %p175, %s176, %s177
      %p181 = pneg %p175
      %p182 = scmp.eq.s32.totalorder %s24, 3
      %p183 = por %p181, %p182
      %p184 = scmp.ne.s32.totalorder %s176, %s179
      %p185 = scmp.eq.s32.totalorder %s24, 0
      %p186 = por %p184, %p185
      %p187 = scmp.ne.s32.totalorder %s176, %s179
      %p188 = scmp.eq.s32.totalorder %s29, 3
      %p189 = por %p187, %p188
      %p190 = scmp.ne.s32.totalorder %s179, %s180
      %p191 = scmp.eq.s32.totalorder %s29, 0
      %p192 = por %p190, %p191
      %p193 = scmp.ne.s32.totalorder %s179, %s180
      %p194 = scmp.eq.s32.totalorder %s30, 3
      %p195 = por %p193, %p194
      %p197 = scmp.ne.s32.totalorder %s180, %s196
      %p198 = scmp.eq.s32.totalorder %s30, 0
      %p199 = por %p197, %p198
      %s200 = ssub.s32 %s31, %s57
      %s201 = ssub.s32 %s32, %s53
      %s202 = sor.u32 %s200, %s201
      %s203 = ssub.s32 %s33, %s49
      %s204 = sor.u32 %s202, %s203
      %p205 = scmp.eq.s32.totalorder %s204, 0
      %s207 = sadd.s32 %s206, 1
      %s208 = scalar_select %p205, %s206, %s207
      %p211 = pneg %p205
      %p212 = scmp.eq.s32.totalorder %s24, 3
      %p213 = por %p211, %p212
      %p214 = scmp.ne.s32.totalorder %s206, %s209
      %p215 = scmp.eq.s32.totalorder %s24, 0
      %p216 = por %p214, %p215
      %p217 = scmp.ne.s32.totalorder %s206, %s209
      %p218 = scmp.eq.s32.totalorder %s29, 3
      %p219 = por %p217, %p218
      %p220 = scmp.ne.s32.totalorder %s209, %s210
      %p221 = scmp.eq.s32.totalorder %s29, 0
      %p222 = por %p220, %p221
      %p223 = scmp.ne.s32.totalorder %s209, %s210
      %p224 = scmp.eq.s32.totalorder %s30, 3
      %p225 = por %p223, %p224
      %p227 = scmp.ne.s32.totalorder %s210, %s226
      %p228 = scmp.eq.s32.totalorder %s30, 0
      %p229 = por %p227, %p228
      %p230 = scmp.le.s32.totalorder 1, %s24
      %p231 = scmp.lt.s32.totalorder %s24, 5
      %p232 = pnand %p230, %p231
      %p233 = pneg %p232
      // Predicated region
      $region9: #{tpu_custom_call.1} parent=5 // pred_check
        _
      $region10: #{tpu_custom_call.1} parent=5 // pred_check_branch
        %235 = sbr.rel (%p232) target = $region12
      $region11: #{tpu_custom_call.1} parent=5 // pred_region
        %s236 = ssub.s32 %s24, 1
        // Predicated region
        $region13: #{tpu_custom_call.1} parent=11 // pred_check
          %p237 = pneg %p192
        $region14: #{tpu_custom_call.1} parent=11 // pred_check_branch
          %239 = sbr.rel (%p237) target = $region16
        $region15: #{tpu_custom_call.1} parent=11 // pred_region
          %s240 = sld [smem:[#allocation6 + %s37]]
          %s241 = ssub.s32 %s240, 1
          %p242 = scmp.lt.s32.totalorder %s38, %s241
          %s243 = scalar_select %p242, %s38, %s241
          %s244 = smul.u32 4, %s37
          %s246 = ssub.s32 256, 256
          %247 = vsyncadd [#allocation15], %s246
          %s248 = sadd.s32 %s243, %s244
          %s249 = smul.addr %s248, 64
          %s250 = scalar_lea.hbm %s5, %s249
          %s251 = sshll.u32 [#allocation14], 4
          %s252 = int_to_ptr.vmem [resolvable:$true] %s251
          %257 = dma.hbm_to_vmem [thread:$0]  %s250, 256, %s252, [#allocation15], 64, 64, 4
        $region16: #{tpu_custom_call.1} parent=11 // pred_fallthru
          _
      $region12: #{tpu_custom_call.1} parent=5 // pred_fallthru
        _
      %p258 = scmp.lt.s32.totalorder %s24, 4
      // Predicated region
      $region17: #{tpu_custom_call.1} parent=5 // pred_check
        %p259 = pneg %p258
      $region18: #{tpu_custom_call.1} parent=5 // pred_check_branch
        %261 = sbr.rel (%p259) target = $region20
      $region19: #{tpu_custom_call.1} parent=5 // pred_region
        // Predicated region
        $region21: #{tpu_custom_call.1} parent=19 // pred_check
          %p262 = pneg %p74
        $region22: #{tpu_custom_call.1} parent=19 // pred_check_branch
          %264 = sbr.rel (%p262) target = $region24
        $region23: #{tpu_custom_call.1} parent=19 // pred_region
          %s265 = sand.u32 %s64, 1
          %s266 = scalar_lea.sflag [#allocation9], %s265
          %s267 = sand.u32 %s64, 1
          %s268 = smul.addr %s267, 32
          %s269 = scalar_lea.vmem [#allocation8], %s268
          %s270 = smul.u32 4, %s33
          %s272 = ssub.s32 512, 512
          %273 = vsyncadd %s266, %s272
          %s274 = smul.addr %s32, 4
          %s275 = sadd.s32 %s270, %s274
          %s276 = smul.addr %s31, 8
          %s277 = sadd.s32 %s275, %s276
          %s278 = smul.addr %s277, 128
          %s279 = scalar_lea.hbm %s2, %s278
          %s280 = sshll.u32 %s269, 4
          %s281 = int_to_ptr.vmem [resolvable:$true] %s280
          %286 = dma.hbm_to_vmem [thread:$0]  %s279, 512, %s281, %s266, 128, 128, 8
        $region24: #{tpu_custom_call.1} parent=19 // pred_fallthru
          _
        // Predicated region
        $region25: #{tpu_custom_call.1} parent=19 // pred_check
          %p287 = pneg %p112
        $region26: #{tpu_custom_call.1} parent=19 // pred_check_branch
          %289 = sbr.rel (%p287) target = $region28
        $region27: #{tpu_custom_call.1} parent=19 // pred_region
          %s290 = sand.u32 %s24, 1
          %s291 = scalar_lea.sflag [#allocation12], %s290
          %s292 = sand.u32 %s102, 1
          %s293 = smul.addr %s292, 32
          %s294 = scalar_lea.vmem [#allocation11], %s293
          %s295 = sld [smem:[#allocation6 + %s33]]
          %s296 = ssub.s32 %s295, 1
          %p297 = scmp.lt.s32.totalorder %s34, %s296
          %s298 = scalar_select %p297, %s34, %s296
          %s299 = smul.u32 4, %s298
          %s301 = ssub.s32 512, 512
          %302 = vsyncadd %s291, %s301
          %s303 = smul.addr %s32, 4
          %s304 = sadd.s32 %s299, %s303
          %s305 = smul.addr %s31, 8
          %s306 = sadd.s32 %s304, %s305
          %s307 = smul.addr %s306, 128
          %s308 = scalar_lea.hbm %s3, %s307
          %s309 = sshll.u32 %s294, 4
          %s310 = int_to_ptr.vmem [resolvable:$true] %s309
          %315 = dma.hbm_to_vmem [thread:$0]  %s308, 512, %s310, %s291, 128, 128, 8
        $region28: #{tpu_custom_call.1} parent=19 // pred_fallthru
          _
        // Predicated region
        $region29: #{tpu_custom_call.1} parent=19 // pred_check
          %p316 = pneg %p150
        $region30: #{tpu_custom_call.1} parent=19 // pred_check_branch
          %318 = sbr.rel (%p316) target = $region32
        $region31: #{tpu_custom_call.1} parent=19 // pred_region
          %s319 = sand.u32 %s24, 1
          %s320 = scalar_lea.sflag [#allocation12], %s319
          %s321 = sand.u32 %s140, 1
          %s322 = smul.addr %s321, 32
          %s323 = scalar_lea.vmem [#allocation13], %s322
          %s324 = sld [smem:[#allocation6 + %s33]]
          %s325 = ssub.s32 %s324, 1
          %p326 = scmp.lt.s32.totalorder %s34, %s325
          %s327 = scalar_select %p326, %s34, %s325
          %s328 = smul.u32 4, %s327
          %s330 = ssub.s32 512, 512
          %331 = vsyncadd %s320, %s330
          %s332 = smul.addr %s32, 4
          %s333 = sadd.s32 %s328, %s332
          %s334 = smul.addr %s31, 8
          %s335 = sadd.s32 %s333, %s334
          %s336 = smul.addr %s335, 128
          %s337 = scalar_lea.hbm %s4, %s336
          %s338 = sshll.u32 %s323, 4
          %s339 = int_to_ptr.vmem [resolvable:$true] %s338
          %344 = dma.hbm_to_vmem [thread:$0]  %s337, 512, %s339, %s320, 128, 128, 8
        $region32: #{tpu_custom_call.1} parent=19 // pred_fallthru
          _
      $region20: #{tpu_custom_call.1} parent=5 // pred_fallthru
        _
      %p345 = scmp.le.s32.totalorder 1, %s24
      %p346 = scmp.lt.s32.totalorder %s24, 5
      %p347 = pnand %p345, %p346
      %p348 = pneg %p347
      // Predicated region
      $region33: #{tpu_custom_call.1} parent=5 // pred_check
        _
      $region34: #{tpu_custom_call.1} parent=5 // pred_check_branch
        %350 = sbr.rel (%p347) target = $region36
      $region35: #{tpu_custom_call.1} parent=5 // pred_region
        %s351 = ssub.s32 %s24, 1
        %s352 = sand.u32 %s67, 1
        %s353 = scalar_lea.sflag [#allocation9], %s352
        %s354 = sand.u32 %s67, 1
        %s355 = smul.addr %s354, 32
        %s356 = scalar_lea.vmem [#allocation8], %s355
        // Predicated region
        $region37: #{tpu_custom_call.1} parent=35 // pred_check
          %p357 = pneg %p80
        $region38: #{tpu_custom_call.1} parent=35 // pred_check_branch
          %359 = sbr.rel (%p357) target = $region40
        $region39: #{tpu_custom_call.1} parent=35 // pred_region
          %360 = dma.done %s353, 512
        $region40: #{tpu_custom_call.1} parent=35 // pred_fallthru
          _
        %s361 = sand.u32 %s29, 1
        %s362 = scalar_lea.sflag [#allocation12], %s361
        %s363 = sand.u32 %s105, 1
        %s364 = smul.addr %s363, 32
        %s365 = scalar_lea.vmem [#allocation11], %s364
        // Predicated region
        $region41: #{tpu_custom_call.1} parent=35 // pred_check
          %p366 = pneg %p118
        $region42: #{tpu_custom_call.1} parent=35 // pred_check_branch
          %368 = sbr.rel (%p366) target = $region44
        $region43: #{tpu_custom_call.1} parent=35 // pred_region
          %369 = dma.done %s362, 512
        $region44: #{tpu_custom_call.1} parent=35 // pred_fallthru
          _
        %s370 = sand.u32 %s29, 1
        %s371 = scalar_lea.sflag [#allocation12], %s370
        %s372 = sand.u32 %s143, 1
        %s373 = smul.addr %s372, 32
        %s374 = scalar_lea.vmem [#allocation13], %s373
        // Predicated region
        $region45: #{tpu_custom_call.1} parent=35 // pred_check
          %p375 = pneg %p156
        $region46: #{tpu_custom_call.1} parent=35 // pred_check_branch
          %377 = sbr.rel (%p375) target = $region48
        $region47: #{tpu_custom_call.1} parent=35 // pred_region
          %378 = dma.done %s371, 512
        $region48: #{tpu_custom_call.1} parent=35 // pred_fallthru
          _
        // Predicated region
        $region49: #{tpu_custom_call.1} parent=35 // pred_check
          %p379 = pneg %p192
        $region50: #{tpu_custom_call.1} parent=35 // pred_check_branch
          %381 = sbr.rel (%p379) target = $region52
        $region51: #{tpu_custom_call.1} parent=35 // pred_region
          %382 = dma.done [#allocation15], 256
        $region52: #{tpu_custom_call.1} parent=35 // pred_fallthru
          _
        %s383 = sand.u32 %s67, 1
        %s384 = scalar_lea.sflag [#allocation9], %s383
        %s385 = sand.u32 %s67, 1
        %s386 = smul.addr %s385, 32
        %s387 = scalar_lea.vmem [#allocation8], %s386
        %p388 = pneg %p80
        %p389 = pneg %p77
        %s390 = sand.u32 %s29, 1
        %s391 = scalar_lea.sflag [#allocation12], %s390
        %s392 = sand.u32 %s105, 1
        %s393 = smul.addr %s392, 32
        %s394 = scalar_lea.vmem [#allocation11], %s393
        %p395 = pneg %p118
        %p396 = pneg %p115
        %s397 = sand.u32 %s29, 1
        %s398 = scalar_lea.sflag [#allocation12], %s397
        %s399 = sand.u32 %s143, 1
        %s400 = smul.addr %s399, 32
        %s401 = scalar_lea.vmem [#allocation13], %s400
        %p402 = pneg %p156
        %p403 = pneg %p153
        %p404 = pneg %p192
        %p405 = pneg %p189
        %p406 = pneg %p222
        %p407 = pneg %p219
        %s408 = sand.u32 %s209, 1
        %s409 = scalar_lea.sflag [#allocation10], %s408
        %s410 = sand.u32 %s209, 1
        %s411 = smul.addr %s410, 32
        %s412 = scalar_lea.vmem [#allocation16], %s411
        %s413 = smul.u32 4, %s37
        %s414 = sld [smem:[#allocation6 + %s37]]
        %s415 = ssub.s32 %s414, 1
        %p416 = scmp.lt.s32.totalorder %s38, %s415
        %s417 = scalar_select %p416, %s38, %s415
        %s418 = smul.u32 4, %s417
        %s419 = sld [smem:[#allocation6 + %s37]]
        %s420 = ssub.s32 %s419, 1
        %p421 = scmp.lt.s32.totalorder %s38, %s420
        %s422 = scalar_select %p421, %s38, %s420
        %s423 = smul.u32 4, %s422
        %s424 = sld [smem:[#allocation6 + %s37]]
        %s425 = ssub.s32 %s424, 1
        %p426 = scmp.lt.s32.totalorder %s38, %s425
        %s427 = scalar_select %p426, %s38, %s425
        %s428 = smul.u32 4, %s37
        %s429 = smul.u32 4, %s37
        %s431 = sld [smem:[#allocation6 + %s37]]
        %p432 = scmp.eq.s32.totalorder %s38, 0
        // Predicated region
        $region53: #{tpu_custom_call.1} parent=35 // pred_check
          %p433 = pneg %p432
        $region54: #{tpu_custom_call.1} parent=35 // pred_check_branch
          %435 = sbr.rel (%p433) target = $region56
        $region55: #{tpu_custom_call.1} parent=35 // pred_region
          %vm436 = vcmask 7168
          %437 = vst.msk [vmem:[#allocation2] sm:$0xff] %vm436, -1.2676506e+30
          %438 = vst.msk [vmem:[#allocation2 + $0x8] sm:$0xff] %vm436, -1.2676506e+30
          %439 = vst.msk [vmem:[#allocation2 + $0x10] sm:$0xff] %vm436, -1.2676506e+30
          %440 = vst.msk [vmem:[#allocation2 + $0x18] sm:$0xff] %vm436, -1.2676506e+30
          %441 = vst.msk [vmem:[#allocation3] sm:$0xff] %vm436, 0.0
          %442 = vst.msk [vmem:[#allocation3 + $0x8] sm:$0xff] %vm436, 0.0
          %443 = vst.msk [vmem:[#allocation3 + $0x10] sm:$0xff] %vm436, 0.0
          %444 = vst.msk [vmem:[#allocation3 + $0x18] sm:$0xff] %vm436, 0.0
          %vm445 = vcmask 261120
          %446 = vst.msk [vmem:[#allocation4] sm:$0xff] %vm445, 0.0
          %447 = vst.msk [vmem:[#allocation4 + $0x8] sm:$0xff] %vm445, 0.0
          %448 = vst.msk [vmem:[#allocation4 + $0x10] sm:$0xff] %vm445, 0.0
          %449 = vst.msk [vmem:[#allocation4 + $0x18] sm:$0xff] %vm445, 0.0
        $region56: #{tpu_custom_call.1} parent=35 // pred_fallthru
          _
        %p450 = scmp.lt.s32.totalorder %s38, %s431
        // Predicated region
        $region57: #{tpu_custom_call.1} parent=35 // pred_check
          %p451 = pneg %p450
        $region58: #{tpu_custom_call.1} parent=35 // pred_check_branch
          %453 = sbr.rel (%p451) target = $region60
        $region59: #{tpu_custom_call.1} parent=35 // pred_region
          %v454 = vld [vmem:[%s356] sm:$0xff]
          %v455 = vld [vmem:[%s356 + $0x8] sm:$0xff]
          %v456 = vld [vmem:[%s356 + $0x10] sm:$0xff]
          %v457 = vld [vmem:[%s356 + $0x18] sm:$0xff]
          %v458 = vmul.f32 %v454, 0.17677669
          %v459 = vmul.f32 %v455, 0.17677669
          %v460 = vmul.f32 %v456, 0.17677669
          %v461 = vmul.f32 %v457, 0.17677669
          %v462 = vpack.c.bf16 %v459, %v458
          %v463 = vpack.c.bf16 %v461, %v460
          %v464 = vld [vmem:[%s365] sm:$0xff]
          %v465 = vld [vmem:[%s365 + $0x8] sm:$0xff]
          %v466 = vld [vmem:[%s365 + $0x10] sm:$0xff]
          %v467 = vld [vmem:[%s365 + $0x18] sm:$0xff]
          %v468 = vpack.c.bf16 %v465, %v464
          %v469 = vpack.c.bf16 %v467, %v466
          %v470 = vld [vmem:[#allocation14] sm:$0xf]
          %v471 = vld [vmem:[#allocation14 + $0x4] sm:$0xf]
          %v472 = vld [vmem:[#allocation14 + $0x8] sm:$0xf]
          %v473 = vld [vmem:[#allocation14 + $0xc] sm:$0xf]
          %v474 = vunpack.c.l.bf16 %v470
          %v475 = vunpack.c.l.bf16 %v471
          %v476 = vunpack.c.l.bf16 %v472
          %v477 = vunpack.c.l.bf16 %v473
          %vm478 = vcmask 261120
          %v480 = vsel %vm478, %v462, 0
          %v483 = vsel %vm478, %v463, 0
          %v486 = vsel %vm478, %v468, 0
          %v489 = vsel %vm478, %v469, 0
          %491 = vmatprep.subr.bf16.mxu0 0
          %492 = vmatpush1.bf16.xpose.msra.mxu0 0
          %493 = vmatprep.subr.bf16.mxu0 0
          %494 = vmatpush1.bf16.xpose.msra.mxu0 0
          %495 = vmatprep.subr.bf16.mxu0 0
          %496 = vmatpush1.bf16.xpose.msra.mxu0 0
          %497 = vmatprep.subr.bf16.mxu0 0
          %498 = vmatpush1.bf16.xpose.msra.mxu0 0
          %499 = vmatprep.subr.bf16.mxu0 0
          %500 = vmatpush1.bf16.xpose.msra.mxu0 0
          %501 = vmatprep.subr.bf16.mxu0 0
          %502 = vmatpush1.bf16.xpose.msra.mxu0 0
          %503 = vmatprep.subr.bf16.mxu0 0
          %504 = vmatpush1.bf16.xpose.msra.mxu0 %v489
          %505 = vmatprep.subr.bf16.mxu0 0
          %506 = vmatpush1.bf16.xpose.msra.mxu0 %v486
          %507 = vmatprep.subr.bf16.mxu0 0
          %508 = vmatpush2.bf16.xpose.msra.mxu0 0
          %509 = vmatprep.subr.bf16.mxu0 0
          %510 = vmatpush2.bf16.xpose.msra.mxu0 0
          %511 = vmatprep.subr.bf16.mxu0 0
          %512 = vmatpush2.bf16.xpose.msra.mxu0 0
          %513 = vmatprep.subr.bf16.mxu0 0
          %514 = vmatpush2.bf16.xpose.msra.mxu0 0
          %515 = vmatprep.subr.bf16.mxu0 0
          %516 = vmatpush2.bf16.xpose.msra.mxu0 0
          %517 = vmatprep.subr.bf16.mxu0 0
          %518 = vmatpush2.bf16.xpose.msra.mxu0 0
          %519 = vmatprep.subr.bf16.mxu0 0
          %520 = vmatpush2.bf16.xpose.msra.mxu0 0
          %521 = vmatprep.subr.bf16.mxu0 0
          %522 = vmatpush2.bf16.xpose.msra.mxu0 0
          %523 = vmatprep.mubr.bf16.mxu0 0
          %524 = vmatmul.mubr.bf16.gmra.mxu0 %v480
          %v525 = vpop.f32.mrf.mxu0
          %v526 = vadd.f32 %v474, %v525
          %v527 = vpop.f32.mrf.mxu0
          %v528 = vpop.f32.mrf.mxu0
          %v529 = vadd.f32 %v475, %v528
          %v530 = vpop.f32.mrf.mxu0
          %531 = vmatprep.mubr.bf16.mxu0 0
          %532 = vmatmul.mubr.bf16.gmra.mxu0 %v483
          %v533 = vpop.f32.mrf.mxu0
          %v534 = vadd.f32 %v476, %v533
          %v535 = vpop.f32.mrf.mxu0
          %v536 = vpop.f32.mrf.mxu0
          %v537 = vadd.f32 %v477, %v536
          %v538 = vpop.f32.mrf.mxu0
          %539 = vdwg.mxu0
          %v540 = vld [vmem:[%s374] sm:$0xff]
          %v541 = vld [vmem:[%s374 + $0x8] sm:$0xff]
          %v542 = vld [vmem:[%s374 + $0x10] sm:$0xff]
          %v543 = vld [vmem:[%s374 + $0x18] sm:$0xff]
          %v544 = vpack.c.bf16 %v541, %v540
          %v545 = vpack.c.bf16 %v543, %v542
          %v546 = vld [vmem:[#allocation2] sm:$0xff]
          %v547 = vld [vmem:[#allocation2 + $0x8] sm:$0xff]
          %v548 = vld [vmem:[#allocation2 + $0x10] sm:$0xff]
          %v549 = vld [vmem:[#allocation2 + $0x18] sm:$0xff]
          %v550 = vsel %vm478, %v526, -inf
          %551 = vmax.xlane.f32.xlu0 %v550
          %v552 = vpop.xlane.xlu0 %551
          %v553 = vsel %vm478, %v529, -inf
          %554 = vmax.xlane.f32.xlu0 %v553
          %v555 = vpop.xlane.xlu0 %554
          %v556 = vsel %vm478, %v534, -inf
          %557 = vmax.xlane.f32.xlu0 %v556
          %v558 = vpop.xlane.xlu0 %557
          %v559 = vsel %vm478, %v537, -inf
          %560 = vmax.xlane.f32.xlu0 %v559
          %v561 = vpop.xlane.xlu0 %560
          %v562 = vmax.f32 %v546, %v552
          %v563 = vmax.f32 %v547, %v555
          %v564 = vmax.f32 %v548, %v558
          %v565 = vmax.f32 %v549, %v561
          %v566 = vsub.f32 %v546, %v562
          %v567 = vsub.f32 %v547, %v563
          %v568 = vsub.f32 %v548, %v564
          %v569 = vsub.f32 %v549, %v565
          %v570 = vmul.f32 %v566, 1.442695
          %v571 = vpow.pop %v570
          %v572 = vmul.f32 %v567, 1.442695
          %v573 = vpow.pop %v572
          %v574 = vmul.f32 %v568, 1.442695
          %v575 = vpow.pop %v574
          %v576 = vmul.f32 %v569, 1.442695
          %v577 = vpow.pop %v576
          %579 = vset.pattern.permute.xlu0 0
          %580 = vperm.xlu0 %579, %v562
          %v581 = vpop.permute.xlu0 %580
          %584 = vset.pattern.permute.xlu0 0
          %585 = vperm.xlu0 %584, %v563
          %v586 = vpop.permute.xlu0 %585
          %589 = vset.pattern.permute.xlu0 0
          %590 = vperm.xlu0 %589, %v564
          %v591 = vpop.permute.xlu0 %590
          %594 = vset.pattern.permute.xlu0 0
          %595 = vperm.xlu0 %594, %v565
          %v596 = vpop.permute.xlu0 %595
          %v598 = vsub.f32 %v526, %v581
          %v599 = vsub.f32 %v529, %v586
          %v600 = vsub.f32 %v534, %v591
          %v601 = vsub.f32 %v537, %v596
          %v602 = vmul.f32 %v598, 1.442695
          %v603 = vpow.pop %v602
          %v604 = vmul.f32 %v599, 1.442695
          %v605 = vpow.pop %v604
          %v606 = vmul.f32 %v600, 1.442695
          %v607 = vpow.pop %v606
          %v608 = vmul.f32 %v601, 1.442695
          %v609 = vpow.pop %v608
          %v610 = vld [vmem:[#allocation3] sm:$0xff]
          %v611 = vld [vmem:[#allocation3 + $0x8] sm:$0xff]
          %v612 = vld [vmem:[#allocation3 + $0x10] sm:$0xff]
          %v613 = vld [vmem:[#allocation3 + $0x18] sm:$0xff]
          %v614 = vmul.f32 %v571, %v610
          %v615 = vmul.f32 %v573, %v611
          %v616 = vmul.f32 %v575, %v612
          %v617 = vmul.f32 %v577, %v613
          %v618 = vsel %vm478, %v603, 0.0
          %619 = vadd.xlane.f32.xlu0 %v618
          %v620 = vpop.xlane.xlu0 %619
          %v621 = vsel %vm478, %v605, 0.0
          %622 = vadd.xlane.f32.xlu0 %v621
          %v623 = vpop.xlane.xlu0 %622
          %v624 = vsel %vm478, %v607, 0.0
          %625 = vadd.xlane.f32.xlu0 %v624
          %v626 = vpop.xlane.xlu0 %625
          %v627 = vsel %vm478, %v609, 0.0
          %628 = vadd.xlane.f32.xlu0 %v627
          %v629 = vpop.xlane.xlu0 %628
          %v630 = vadd.f32 %v614, %v620
          %v631 = vadd.f32 %v615, %v623
          %v632 = vadd.f32 %v616, %v626
          %v633 = vadd.f32 %v617, %v629
          %vm634 = vcmask 7168
          %635 = vst.msk [vmem:[#allocation3] sm:$0xff] %vm634, %v630
          %636 = vst.msk [vmem:[#allocation3 + $0x8] sm:$0xff] %vm634, %v631
          %637 = vst.msk [vmem:[#allocation3 + $0x10] sm:$0xff] %vm634, %v632
          %638 = vst.msk [vmem:[#allocation3 + $0x18] sm:$0xff] %vm634, %v633
          %v639 = vld [vmem:[#allocation4] sm:$0xff]
          %v640 = vld [vmem:[#allocation4 + $0x8] sm:$0xff]
          %v641 = vld [vmem:[#allocation4 + $0x10] sm:$0xff]
          %v642 = vld [vmem:[#allocation4 + $0x18] sm:$0xff]
          %644 = vset.pattern.permute.xlu0 0
          %645 = vperm.xlu0 %644, %v571
          %v646 = vpop.permute.xlu0 %645
          %649 = vset.pattern.permute.xlu0 0
          %650 = vperm.xlu0 %649, %v573
          %v651 = vpop.permute.xlu0 %650
          %654 = vset.pattern.permute.xlu0 0
          %655 = vperm.xlu0 %654, %v575
          %v656 = vpop.permute.xlu0 %655
          %659 = vset.pattern.permute.xlu0 0
          %660 = vperm.xlu0 %659, %v577
          %v661 = vpop.permute.xlu0 %660
          %v663 = vmul.f32 %v646, %v639
          %v664 = vmul.f32 %v651, %v640
          %v665 = vmul.f32 %v656, %v641
          %v666 = vmul.f32 %v661, %v642
          %v667 = vpack.c.bf16 %v605, %v603
          %v668 = vpack.c.bf16 %v609, %v607
          %v670 = vsel %vm478, %v667, 0
          %v673 = vsel %vm478, %v668, 0
          %675 = vmatprep.subr.bf16.mxu0 0
          %676 = vmatpush1.bf16.msra.mxu0 0
          %677 = vmatprep.subr.bf16.mxu0 0
          %678 = vmatpush1.bf16.msra.mxu0 0
          %679 = vmatprep.subr.bf16.mxu0 0
          %680 = vmatpush1.bf16.msra.mxu0 0
          %681 = vmatprep.subr.bf16.mxu0 0
          %682 = vmatpush1.bf16.msra.mxu0 0
          %683 = vmatprep.subr.bf16.mxu0 0
          %684 = vmatpush1.bf16.msra.mxu0 0
          %685 = vmatprep.subr.bf16.mxu0 0
          %686 = vmatpush1.bf16.msra.mxu0 0
          %687 = vmatprep.subr.bf16.mxu0 0
          %688 = vmatpush1.bf16.msra.mxu0 %v545
          %689 = vmatprep.subr.bf16.mxu0 0
          %690 = vmatpush1.bf16.msra.mxu0 %v544
          %691 = vmatprep.subr.bf16.mxu0 0
          %692 = vmatpush2.bf16.msra.mxu0 0
          %693 = vmatprep.subr.bf16.mxu0 0
          %694 = vmatpush2.bf16.msra.mxu0 0
          %695 = vmatprep.subr.bf16.mxu0 0
          %696 = vmatpush2.bf16.msra.mxu0 0
          %697 = vmatprep.subr.bf16.mxu0 0
          %698 = vmatpush2.bf16.msra.mxu0 0
          %699 = vmatprep.subr.bf16.mxu0 0
          %700 = vmatpush2.bf16.msra.mxu0 0
          %701 = vmatprep.subr.bf16.mxu0 0
          %702 = vmatpush2.bf16.msra.mxu0 0
          %703 = vmatprep.subr.bf16.mxu0 0
          %704 = vmatpush2.bf16.msra.mxu0 0
          %705 = vmatprep.subr.bf16.mxu0 0
          %706 = vmatpush2.bf16.msra.mxu0 0
          %707 = vmatprep.mubr.bf16.mxu0 0
          %708 = vmatmul.mubr.bf16.gmra.mxu0 %v670
          %v709 = vpop.f32.mrf.mxu0
          %v710 = vadd.f32 0.0, %v709
          %v711 = vpop.f32.mrf.mxu0
          %v712 = vpop.f32.mrf.mxu0
          %v713 = vadd.f32 0.0, %v712
          %v714 = vpop.f32.mrf.mxu0
          %715 = vmatprep.mubr.bf16.mxu0 0
          %716 = vmatmul.mubr.bf16.gmra.mxu0 %v673
          %v717 = vpop.f32.mrf.mxu0
          %v718 = vadd.f32 0.0, %v717
          %v719 = vpop.f32.mrf.mxu0
          %v720 = vpop.f32.mrf.mxu0
          %v721 = vadd.f32 0.0, %v720
          %v722 = vpop.f32.mrf.mxu0
          %723 = vdwg.mxu0
          %v724 = vadd.f32 %v663, %v710
          %v725 = vadd.f32 %v664, %v713
          %v726 = vadd.f32 %v665, %v718
          %v727 = vadd.f32 %v666, %v721
          %728 = vst.msk [vmem:[#allocation4] sm:$0xff] %vm478, %v724
          %729 = vst.msk [vmem:[#allocation4 + $0x8] sm:$0xff] %vm478, %v725
          %730 = vst.msk [vmem:[#allocation4 + $0x10] sm:$0xff] %vm478, %v726
          %731 = vst.msk [vmem:[#allocation4 + $0x18] sm:$0xff] %vm478, %v727
          %732 = vst.msk [vmem:[#allocation2] sm:$0xff] %vm634, %v562
          %733 = vst.msk [vmem:[#allocation2 + $0x8] sm:$0xff] %vm634, %v563
          %734 = vst.msk [vmem:[#allocation2 + $0x10] sm:$0xff] %vm634, %v564
          %735 = vst.msk [vmem:[#allocation2 + $0x18] sm:$0xff] %vm634, %v565
        $region60: #{tpu_custom_call.1} parent=35 // pred_fallthru
          _
        // Predicated region
        $region61: #{tpu_custom_call.1} parent=35 // pred_check
          %p736 = pneg %p432
        $region62: #{tpu_custom_call.1} parent=35 // pred_check_branch
          %738 = sbr.rel (%p736) target = $region64
        $region63: #{tpu_custom_call.1} parent=35 // pred_region
          %v739 = vld [vmem:[#allocation3] sm:$0xff]
          %v740 = vld [vmem:[#allocation3 + $0x8] sm:$0xff]
          %v741 = vld [vmem:[#allocation3 + $0x10] sm:$0xff]
          %v742 = vld [vmem:[#allocation3 + $0x18] sm:$0xff]
          %v743 = vrcp.pop %v739
          %v744 = vrcp.pop %v740
          %v745 = vrcp.pop %v741
          %v746 = vrcp.pop %v742
          %v747 = vld [vmem:[#allocation4] sm:$0xff]
          %v748 = vld [vmem:[#allocation4 + $0x8] sm:$0xff]
          %v749 = vld [vmem:[#allocation4 + $0x10] sm:$0xff]
          %v750 = vld [vmem:[#allocation4 + $0x18] sm:$0xff]
          %752 = vset.pattern.permute.xlu0 0
          %753 = vperm.xlu0 %752, %v743
          %v754 = vpop.permute.xlu0 %753
          %757 = vset.pattern.permute.xlu0 0
          %758 = vperm.xlu0 %757, %v744
          %v759 = vpop.permute.xlu0 %758
          %762 = vset.pattern.permute.xlu0 0
          %763 = vperm.xlu0 %762, %v745
          %v764 = vpop.permute.xlu0 %763
          %767 = vset.pattern.permute.xlu0 0
          %768 = vperm.xlu0 %767, %v746
          %v769 = vpop.permute.xlu0 %768
          %v771 = vmul.f32 %v747, %v754
          %v772 = vmul.f32 %v748, %v759
          %v773 = vmul.f32 %v749, %v764
          %v774 = vmul.f32 %v750, %v769
          %vm775 = vcmask 261120
          %776 = vst.msk [vmem:[%s412] sm:$0xff] %vm775, %v771
          %777 = vst.msk [vmem:[%s412 + $0x8] sm:$0xff] %vm775, %v772
          %778 = vst.msk [vmem:[%s412 + $0x10] sm:$0xff] %vm775, %v773
          %779 = vst.msk [vmem:[%s412 + $0x18] sm:$0xff] %vm775, %v774
        $region64: #{tpu_custom_call.1} parent=35 // pred_fallthru
          _
        %s780 = sand.u32 %s209, 1
        %s781 = scalar_lea.sflag [#allocation10], %s780
        %s782 = sand.u32 %s209, 1
        %s783 = smul.addr %s782, 32
        %s784 = scalar_lea.vmem [#allocation16], %s783
        // Predicated region
        $region65: #{tpu_custom_call.1} parent=35 // pred_check
          %p785 = pneg %p219
        $region66: #{tpu_custom_call.1} parent=35 // pred_check_branch
          %787 = sbr.rel (%p785) target = $region68
        $region67: #{tpu_custom_call.1} parent=35 // pred_region
          %s788 = smul.u32 4, %s37
          %s790 = ssub.s32 512, 512
          %791 = vsyncadd %s781, %s790
          %s792 = smul.addr %s36, 4
          %s793 = sadd.s32 %s788, %s792
          %s794 = smul.addr %s35, 8
          %s795 = sadd.s32 %s793, %s794
          %s796 = smul.addr %s795, 128
          %s797 = scalar_lea.hbm %s6, %s796
          %s798 = sshll.u32 %s784, 4
          %s799 = int_to_ptr.vmem [resolvable:$true] %s798
          %804 = dma.vmem_to_hbm [thread:$0]  %s799, 512, %s797, %s781, 128, 128, 8
        $region68: #{tpu_custom_call.1} parent=35 // pred_fallthru
          _
      $region36: #{tpu_custom_call.1} parent=5 // pred_fallthru
        _
      %p805 = scmp.le.s32.totalorder 2, %s24
      // Predicated region
      $region69: #{tpu_custom_call.1} parent=5 // pred_check
        %p806 = pneg %p805
      $region70: #{tpu_custom_call.1} parent=5 // pred_check_branch
        %808 = sbr.rel (%p806) target = $region72
      $region71: #{tpu_custom_call.1} parent=5 // pred_region
        %s809 = ssub.s32 %s24, 2
        // Predicated region
        $region73: #{tpu_custom_call.1} parent=71 // pred_check
          %p810 = pneg %p225
        $region74: #{tpu_custom_call.1} parent=71 // pred_check_branch
          %812 = sbr.rel (%p810) target = $region76
        $region75: #{tpu_custom_call.1} parent=71 // pred_region
          %s813 = sand.u32 %s210, 1
          %s814 = scalar_lea.sflag [#allocation10], %s813
          %s815 = sand.u32 %s210, 1
          %s816 = smul.addr %s815, 32
          %s817 = scalar_lea.vmem [#allocation16], %s816
          %818 = dma.done %s814, 512
        $region76: #{tpu_custom_call.1} parent=71 // pred_fallthru
          _
      $region72: #{tpu_custom_call.1} parent=5 // pred_fallthru
        _
    $region6: #{tpu_custom_call.1} parent=1 // loop_footer
      %s28 = sadd.s32 1, %s24
    $region7: #{tpu_custom_call.1} parent=1 // loop_footer_branch
      %23 = sbr.rel target = $region3
    $region8: #{tpu_custom_call.1} parent=1 // loop_exit
      _
    %819 = vsyncpa [#allocation9], 1
    %s820 = scalar_lea.sflag [#allocation9], 1
    %821 = vsyncpa %s820, 1
    %822 = vsyncpa [#allocation12], 1
    %s823 = scalar_lea.sflag [#allocation12], 1
    %824 = vsyncpa %s823, 1
    %825 = vsyncpa [#allocation15], 1
    %826 = vsyncpa [#allocation10], 1
    %s827 = scalar_lea.sflag [#allocation10], 1
    %828 = vsyncpa %s827, 1

</llo_original>
